<compile_context>
chip_gen: v5e
topology: v5e:2x2
jax: 0.10.0
libtpu: 0.0.40
codegen_flags: <defaults>
</compile_context>

<pallas_src>
import functools

import jax
import jax.numpy as jnp
from jax.experimental import pallas as pl
from jax.experimental.pallas import tpu as pltpu


def _conv_kernel(x_ref, w_ref, b_ref, o_ref, *, K, Cin, Wp, HWp, Bblk):
    # x_ref : (Bblk, Cin, Lflat)   bf16, zero-padded, row-flattened input
    # w_ref : (Cout, K*K*Cin)      bf16 weights, tap-major / cin-minor columns
    # b_ref : (Cout, 1)            f32 bias
    # o_ref : (Bblk, Cout, HWp)    output, spatial flattened with stride Wp
    w = w_ref[...]          # (Cout, K*K*Cin), tiny, lives in a few vregs
    bias = b_ref[...]       # (Cout, 1) f32, sublane broadcast on the add
    for bb in range(Bblk):
        acc = None
        for kh in range(K):
            for kw in range(K):
                t = kh * K + kw
                off = kh * Wp + kw              # static lane offset of this tap
                # (Cout, Cin) @ (Cin, HWp) -> (Cout, HWp), f32 accumulator.
                part = jnp.dot(
                    w[:, t * Cin:(t + 1) * Cin],
                    x_ref[bb, :, off:off + HWp],
                    preferred_element_type=jnp.float32,
                )
                acc = part if acc is None else acc + part
        o_ref[bb, :, :] = (acc + bias).astype(o_ref.dtype)     # lane-dense store


def my_convo2d_pallas(x_nchw, weight_oihw, bias, kernel_size, *, bblk=None):
    """Forward pass matching PyTorch MyConvo2d (stride=1, padding=(k-1)//2)."""
    B, Cin, H, W = x_nchw.shape
    Cout = weight_oihw.shape[0]
    K = int(kernel_size)
    assert K % 2 == 1, "MyConvo2d same-padding requires odd kernel_size"
    pad = (K - 1) // 2

    Wp = W + 2 * pad            # padded width == output row stride
    HWp = H * Wp                # flattened output length per image (lane dim)
    Hp_ext = H + 2 * pad + 1    # +1 extra zero row so the largest tap slice
    Lflat = Hp_ext * Wp         #   [off, off+H*Wp) stays in bounds

    if bblk is None:
        # Even B: two chunks so both v7x TensorCores get work; odd B / B==1:
        # one fused step (per-step overhead dominates on single-TC v5e/v6e).
        bblk = B // 2 if (B > 1 and B % 2 == 0) else B
    assert B % bblk == 0, "batch block must divide the batch"
    n_steps = B // bblk

    # bf16 activations end-to-end (f32 accumulation in-kernel).  Pad once with
    # zeros and flatten rows; every tap is then a contiguous lane offset.
    x_flat = jnp.pad(
        x_nchw.astype(jnp.bfloat16),
        ((0, 0), (0, 0), (pad, pad + 1), (pad, pad)),
    ).reshape(B, Cin, Lflat)

    # OIHW -> (Cout, kh, kw, cin) -> (Cout, K*K*Cin): columns ordered
    # tap-major / cin-minor to match the per-tap slices in the kernel.
    w2d = jnp.transpose(weight_oihw, (0, 2, 3, 1)).reshape(Cout, K * K * Cin)
    w2d = w2d.astype(jnp.bfloat16)
    b2d = bias.reshape(Cout, 1).astype(jnp.float32)

    kernel = functools.partial(
        _conv_kernel, K=K, Cin=Cin, Wp=Wp, HWp=HWp, Bblk=bblk)

    out_flat = pl.pallas_call(
        kernel,
        out_shape=jax.ShapeDtypeStruct((B, Cout, HWp), x_nchw.dtype),
        grid_spec=pltpu.PrefetchScalarGridSpec(
            num_scalar_prefetch=0,
            grid=(n_steps,),
            in_specs=[
                pl.BlockSpec((bblk, Cin, Lflat), lambda i: (i, 0, 0)),
                pl.BlockSpec((Cout, K * K * Cin), lambda i: (0, 0)),
                pl.BlockSpec((Cout, 1), lambda i: (0, 0)),
            ],
            out_specs=pl.BlockSpec((bblk, Cout, HWp), lambda i: (i, 0, 0)),
        ),
        compiler_params=pltpu.CompilerParams(
            dimension_semantics=("parallel",),   # batch chunks -> v7x TCs
            vmem_limit_bytes=32 * 1024 * 1024,   # explicit; fits all chips here
        ),
    )(x_flat, w2d, b2d)

    # Already NCHW-flat: drop the Wp-stride padding columns (cheap compaction).
    return out_flat.reshape(B, Cout, H, Wp)[:, :, :, :W]


if __name__ == "__main__":
    # Shapes consistent with MyConvo2d(input_dim=4, output_dim=8, kernel_size=3)
    B, Cin, H, W = 2, 4, 16, 16
    Cout, K = 8, 3

    key = jax.random.PRNGKey(0)
    kx, kw, kb = jax.random.split(key, 3)
    x = jax.random.normal(kx, (B, Cin, H, W), dtype=jnp.float32)
    weight = jax.random.normal(kw, (Cout, Cin, K, K), dtype=jnp.float32) * 0.1
    bias = jax.random.normal(kb, (Cout,), dtype=jnp.float32) * 0.1

    out = jax.block_until_ready(my_convo2d_pallas(x, weight, bias, K))

    # Reference: XLA conv fed the same bf16-rounded operands the kernel gives
    # the MXU (accumulation stays f32), so tolerances can stay tight.
    xq = x.astype(jnp.bfloat16).astype(jnp.float32)
    wq = weight.astype(jnp.bfloat16).astype(jnp.float32)
    pad = (K - 1) // 2
    ref = jax.lax.conv_general_dilated(
        xq, wq, window_strides=(1, 1),
        padding=[(pad, pad), (pad, pad)],
        dimension_numbers=("NCHW", "OIHW", "NCHW"),
    ) + bias.reshape(1, Cout, 1, 1)

    assert out.shape == (B, Cout, H, W)
    assert jnp.allclose(out, ref, atol=2e-3, rtol=2e-3), \
        float(jnp.max(jnp.abs(out - ref)))
    print("KERNEL_OK")
</pallas_src>

<mosaic_0001>
module attributes {stable_mosaic.version = 11 : i64} {
  func.func @_conv_kernel(%arg0: i32, %arg1: memref<1x4x342xbf16, #tpu.memory_space<vmem>>, %arg2: memref<8x36xbf16, #tpu.memory_space<vmem>>, %arg3: memref<8x1xf32, #tpu.memory_space<vmem>>, %arg4: memref<1x8x288xf32, #tpu.memory_space<vmem>>) attributes {dimension_semantics = [#tpu.dimension_semantics<parallel>], iteration_bounds = array<i64: 2>, scalar_prefetch = 0 : i64, scratch_operands = 0 : i64, tpu.core_type = #tpu.core_type<tc>, window_params = [{transform_indices = @transform_0, window_bounds = array<i64: 1, 4, 342>}, {pipeline_mode = #tpu.pipeline_mode<synchronous>, transform_indices = @transform_1, window_bounds = array<i64: 8, 36>}, {pipeline_mode = #tpu.pipeline_mode<synchronous>, transform_indices = @transform_2, window_bounds = array<i64: 8, 1>}, {transform_indices = @transform_3, window_bounds = array<i64: 1, 8, 288>}]} {
    %c0 = arith.constant 0 : index
    %c0_0 = arith.constant 0 : index
    %0 = vector.load %arg2[%c0, %c0_0] : memref<8x36xbf16, #tpu.memory_space<vmem>>, vector<8x36xbf16>
    %c0_1 = arith.constant 0 : index
    %c0_2 = arith.constant 0 : index
    %1 = vector.load %arg3[%c0_1, %c0_2] : memref<8x1xf32, #tpu.memory_space<vmem>>, vector<8x1xf32>
    %2 = vector.extract_strided_slice %0 {offsets = [0, 0], sizes = [8, 4], strides = [1, 1]} : vector<8x36xbf16> to vector<8x4xbf16>
    %c0_3 = arith.constant 0 : index
    %c0_4 = arith.constant 0 : index
    %c0_5 = arith.constant 0 : index
    %3 = vector.load %arg1[%c0_3, %c0_4, %c0_5] : memref<1x4x342xbf16, #tpu.memory_space<vmem>>, vector<1x4x288xbf16>
    %4 = vector.shape_cast %3 : vector<1x4x288xbf16> to vector<4x288xbf16>
    %cst = arith.constant dense<0.000000e+00> : vector<8x288xf32>
    %5 = tpu.matmul %2, %4, %cst {dimension_numbers = #tpu.dot_dimension_numbers<[1], [0], [0], [1], [0, 0, 1, 1], [], []>} : vector<8x4xbf16>, vector<4x288xbf16>, vector<8x288xf32> -> vector<8x288xf32>
    %6 = vector.extract_strided_slice %0 {offsets = [0, 4], sizes = [8, 4], strides = [1, 1]} : vector<8x36xbf16> to vector<8x4xbf16>
    %c0_6 = arith.constant 0 : index
    %c0_7 = arith.constant 0 : index
    %c1 = arith.constant 1 : index
    %7 = vector.load %arg1[%c0_6, %c0_7, %c1] : memref<1x4x342xbf16, #tpu.memory_space<vmem>>, vector<1x4x288xbf16>
    %8 = vector.shape_cast %7 : vector<1x4x288xbf16> to vector<4x288xbf16>
    %cst_8 = arith.constant dense<0.000000e+00> : vector<8x288xf32>
    %9 = tpu.matmul %6, %8, %cst_8 {dimension_numbers = #tpu.dot_dimension_numbers<[1], [0], [0], [1], [0, 0, 1, 1], [], []>} : vector<8x4xbf16>, vector<4x288xbf16>, vector<8x288xf32> -> vector<8x288xf32>
    %10 = arith.addf %5, %9 : vector<8x288xf32>
    %11 = vector.extract_strided_slice %0 {offsets = [0, 8], sizes = [8, 4], strides = [1, 1]} : vector<8x36xbf16> to vector<8x4xbf16>
    %c0_9 = arith.constant 0 : index
    %c0_10 = arith.constant 0 : index
    %c2 = arith.constant 2 : index
    %12 = vector.load %arg1[%c0_9, %c0_10, %c2] : memref<1x4x342xbf16, #tpu.memory_space<vmem>>, vector<1x4x288xbf16>
    %13 = vector.shape_cast %12 : vector<1x4x288xbf16> to vector<4x288xbf16>
    %cst_11 = arith.constant dense<0.000000e+00> : vector<8x288xf32>
    %14 = tpu.matmul %11, %13, %cst_11 {dimension_numbers = #tpu.dot_dimension_numbers<[1], [0], [0], [1], [0, 0, 1, 1], [], []>} : vector<8x4xbf16>, vector<4x288xbf16>, vector<8x288xf32> -> vector<8x288xf32>
    %15 = arith.addf %10, %14 : vector<8x288xf32>
    %16 = vector.extract_strided_slice %0 {offsets = [0, 12], sizes = [8, 4], strides = [1, 1]} : vector<8x36xbf16> to vector<8x4xbf16>
    %c0_12 = arith.constant 0 : index
    %c0_13 = arith.constant 0 : index
    %c18 = arith.constant 18 : index
    %17 = vector.load %arg1[%c0_12, %c0_13, %c18] : memref<1x4x342xbf16, #tpu.memory_space<vmem>>, vector<1x4x288xbf16>
    %18 = vector.shape_cast %17 : vector<1x4x288xbf16> to vector<4x288xbf16>
    %cst_14 = arith.constant dense<0.000000e+00> : vector<8x288xf32>
    %19 = tpu.matmul %16, %18, %cst_14 {dimension_numbers = #tpu.dot_dimension_numbers<[1], [0], [0], [1], [0, 0, 1, 1], [], []>} : vector<8x4xbf16>, vector<4x288xbf16>, vector<8x288xf32> -> vector<8x288xf32>
    %20 = arith.addf %15, %19 : vector<8x288xf32>
    %21 = vector.extract_strided_slice %0 {offsets = [0, 16], sizes = [8, 4], strides = [1, 1]} : vector<8x36xbf16> to vector<8x4xbf16>
    %c0_15 = arith.constant 0 : index
    %c0_16 = arith.constant 0 : index
    %c19 = arith.constant 19 : index
    %22 = vector.load %arg1[%c0_15, %c0_16, %c19] : memref<1x4x342xbf16, #tpu.memory_space<vmem>>, vector<1x4x288xbf16>
    %23 = vector.shape_cast %22 : vector<1x4x288xbf16> to vector<4x288xbf16>
    %cst_17 = arith.constant dense<0.000000e+00> : vector<8x288xf32>
    %24 = tpu.matmul %21, %23, %cst_17 {dimension_numbers = #tpu.dot_dimension_numbers<[1], [0], [0], [1], [0, 0, 1, 1], [], []>} : vector<8x4xbf16>, vector<4x288xbf16>, vector<8x288xf32> -> vector<8x288xf32>
    %25 = arith.addf %20, %24 : vector<8x288xf32>
    %26 = vector.extract_strided_slice %0 {offsets = [0, 20], sizes = [8, 4], strides = [1, 1]} : vector<8x36xbf16> to vector<8x4xbf16>
    %c0_18 = arith.constant 0 : index
    %c0_19 = arith.constant 0 : index
    %c20 = arith.constant 20 : index
    %27 = vector.load %arg1[%c0_18, %c0_19, %c20] : memref<1x4x342xbf16, #tpu.memory_space<vmem>>, vector<1x4x288xbf16>
    %28 = vector.shape_cast %27 : vector<1x4x288xbf16> to vector<4x288xbf16>
    %cst_20 = arith.constant dense<0.000000e+00> : vector<8x288xf32>
    %29 = tpu.matmul %26, %28, %cst_20 {dimension_numbers = #tpu.dot_dimension_numbers<[1], [0], [0], [1], [0, 0, 1, 1], [], []>} : vector<8x4xbf16>, vector<4x288xbf16>, vector<8x288xf32> -> vector<8x288xf32>
    %30 = arith.addf %25, %29 : vector<8x288xf32>
    %31 = vector.extract_strided_slice %0 {offsets = [0, 24], sizes = [8, 4], strides = [1, 1]} : vector<8x36xbf16> to vector<8x4xbf16>
    %c0_21 = arith.constant 0 : index
    %c0_22 = arith.constant 0 : index
    %c36 = arith.constant 36 : index
    %32 = vector.load %arg1[%c0_21, %c0_22, %c36] : memref<1x4x342xbf16, #tpu.memory_space<vmem>>, vector<1x4x288xbf16>
    %33 = vector.shape_cast %32 : vector<1x4x288xbf16> to vector<4x288xbf16>
    %cst_23 = arith.constant dense<0.000000e+00> : vector<8x288xf32>
    %34 = tpu.matmul %31, %33, %cst_23 {dimension_numbers = #tpu.dot_dimension_numbers<[1], [0], [0], [1], [0, 0, 1, 1], [], []>} : vector<8x4xbf16>, vector<4x288xbf16>, vector<8x288xf32> -> vector<8x288xf32>
    %35 = arith.addf %30, %34 : vector<8x288xf32>
    %36 = vector.extract_strided_slice %0 {offsets = [0, 28], sizes = [8, 4], strides = [1, 1]} : vector<8x36xbf16> to vector<8x4xbf16>
    %c0_24 = arith.constant 0 : index
    %c0_25 = arith.constant 0 : index
    %c37 = arith.constant 37 : index
    %37 = vector.load %arg1[%c0_24, %c0_25, %c37] : memref<1x4x342xbf16, #tpu.memory_space<vmem>>, vector<1x4x288xbf16>
    %38 = vector.shape_cast %37 : vector<1x4x288xbf16> to vector<4x288xbf16>
    %cst_26 = arith.constant dense<0.000000e+00> : vector<8x288xf32>
    %39 = tpu.matmul %36, %38, %cst_26 {dimension_numbers = #tpu.dot_dimension_numbers<[1], [0], [0], [1], [0, 0, 1, 1], [], []>} : vector<8x4xbf16>, vector<4x288xbf16>, vector<8x288xf32> -> vector<8x288xf32>
    %40 = arith.addf %35, %39 : vector<8x288xf32>
    %41 = vector.extract_strided_slice %0 {offsets = [0, 32], sizes = [8, 4], strides = [1, 1]} : vector<8x36xbf16> to vector<8x4xbf16>
    %c0_27 = arith.constant 0 : index
    %c0_28 = arith.constant 0 : index
    %c38 = arith.constant 38 : index
    %42 = vector.load %arg1[%c0_27, %c0_28, %c38] : memref<1x4x342xbf16, #tpu.memory_space<vmem>>, vector<1x4x288xbf16>
    %43 = vector.shape_cast %42 : vector<1x4x288xbf16> to vector<4x288xbf16>
    %cst_29 = arith.constant dense<0.000000e+00> : vector<8x288xf32>
    %44 = tpu.matmul %41, %43, %cst_29 {dimension_numbers = #tpu.dot_dimension_numbers<[1], [0], [0], [1], [0, 0, 1, 1], [], []>} : vector<8x4xbf16>, vector<4x288xbf16>, vector<8x288xf32> -> vector<8x288xf32>
    %45 = arith.addf %40, %44 : vector<8x288xf32>
    %46 = vector.broadcast %1 : vector<8x1xf32> to vector<8x288xf32>
    %47 = arith.addf %45, %46 : vector<8x288xf32>
    %c0_30 = arith.constant 0 : index
    %c0_31 = arith.constant 0 : index
    %c0_32 = arith.constant 0 : index
    %48 = vector.load %arg4[%c0_30, %c0_31, %c0_32] : memref<1x8x288xf32, #tpu.memory_space<vmem>>, vector<1x8x288xf32>
    %49 = vector.shape_cast %48 : vector<1x8x288xf32> to vector<8x288xf32>
    %50 = vector.shape_cast %47 : vector<8x288xf32> to vector<1x8x288xf32>
    tpu.vector_store %arg4[%c0_30, %c0_31, %c0_32], %50 {strides = array<i32>} : memref<1x8x288xf32, #tpu.memory_space<vmem>>, vector<1x8x288xf32>,
    return
  }
  func.func @transform_0(%arg0: i32) -> (i32, i32, i32) {
    %c0_i32 = arith.constant 0 : i32
    %c0_i32_0 = arith.constant 0 : i32
    %c0_i32_1 = arith.constant 0 : i32
    return %arg0, %c0_i32, %c0_i32_0 : i32, i32, i32
  }
  func.func @transform_1(%arg0: i32) -> (i32, i32) {
    %c0_i32 = arith.constant 0 : i32
    %c0_i32_0 = arith.constant 0 : i32
    %c0_i32_1 = arith.constant 0 : i32
    return %c0_i32, %c0_i32_0 : i32, i32
  }
  func.func @transform_2(%arg0: i32) -> (i32, i32) {
    %c0_i32 = arith.constant 0 : i32
    %c0_i32_0 = arith.constant 0 : i32
    %c0_i32_1 = arith.constant 0 : i32
    return %c0_i32, %c0_i32_0 : i32, i32
  }
  func.func @transform_3(%arg0: i32) -> (i32, i32, i32) {
    %c0_i32 = arith.constant 0 : i32
    %c0_i32_0 = arith.constant 0 : i32
    %c0_i32_1 = arith.constant 0 : i32
    return %arg0, %c0_i32, %c0_i32_0 : i32, i32, i32
  }
}

</mosaic_0001>

<llo_original>
// kernel: tpu_custom_call.1
$region0: #{tpu_custom_call.1}
  #allocation0 [shape = 'u32[]', space=smem, size = 0x4, offset = 0x4, fixed_abs, tag = 'smem constant byte address 0x4 - core index']
  #allocation1 [shape = 'u32[72,128]{1,0:T(1,128)}', space=vmem, size = 0x9000, scoped, tag = 'internal scratch']
  %s0 = inlined_call_operand.hbm [shape: bf16[2,4,342], index: 0, kind: input, shape index: {}]
  %s1 = inlined_call_operand.vmem [shape: bf16[8,36], index: 1, kind: input, shape index: {}]
  %s2 = inlined_call_operand.vmem [shape: f32[8,1], index: 2, kind: input, shape index: {}]
  %s3 = inlined_call_operand.hbm [shape: f32[2,8,288], index: 3, kind: output, shape index: {}]
  %s4 = sld [smem:[#allocation0]]
  $region49: #{tpu_custom_call.1} parent=0
    _
  %s6 = ssub.s32 1, %s4
  %s7 = scalar_select 0, %s6, %s4
  $region1: #{tpu_custom_call.1} parent=0
    #allocation2 [shape = 'u8[6144]{0}', space=vmem, size = 0x1800, scoped, tag = 'input window, operand 0']
    #allocation3 [shape = 's32[2]{0}', space=sflag, size = 0x8, scoped, tag = 'scoped memory for tpu_custom_call.1']
    #allocation4 [shape = 's32[2]{0}', space=sflag, size = 0x8, scoped, tag = 'scoped memory for tpu_custom_call.1']
    #allocation5 [shape = 'u8[24576]{0}', space=vmem, size = 0x6000, scoped, tag = 'output window, operand 0']
    %8 = vsyncpa [#allocation3], 0
    %s9 = scalar_lea.sflag [#allocation3], 1
    %10 = vsyncpa %s9, 0
    %11 = vsyncpa [#allocation4], 0
    %s12 = scalar_lea.sflag [#allocation4], 1
    %13 = vsyncpa %s12, 0
    loop: start=0, step=1, limit=4
    $region2: #{tpu_custom_call.1} parent=1 // loop_pre_header
      _
    $region3: #{tpu_custom_call.1} parent=1 // loop_header
      %s15 = sphi 0, %s19
      %p16 = scmp.ge.s32.totalorder %s15, 4
      %s25 = sphi 0, %s27
      %s28 = sphi 0, %s25
      %s29 = sphi 0, %s28
      %s45 = sphi 0, %s29
      %s49 = sphi 0, %s49
      %s51 = sphi 0, %s49
      %s52 = sphi 0, %s51
      %s66 = sphi 0, %s52
      %s70 = sphi 0, %s70
      %s72 = sphi 0, %s70
      %s73 = sphi 0, %s72
      %s87 = sphi 0, %s73
      %s93 = sphi 0, %s95
      %s96 = sphi 0, %s93
      %s97 = sphi 0, %s96
      %s113 = sphi 0, %s97
    $region4: #{tpu_custom_call.1} parent=1 // loop_header_branch
      %18 = sbr.rel (%p16) target = $region8
    $region5: #{tpu_custom_call.1} parent=1 // loop_body
      %s20 = ssub.s32 %s15, 1
      %s21 = ssub.s32 %s15, 2
      %s22 = sadd.s32 %s15, 1
      %s23 = ssub.s32 %s15, %s22
      %p24 = scmp.eq.s32.totalorder %s23, 0
      %s26 = sadd.s32 %s25, 1
      %s27 = scalar_select %p24, %s25, %s26
      %p30 = pneg %p24
      %p31 = scmp.eq.s32.totalorder %s15, 1
      %p32 = por %p30, %p31
      %p33 = scmp.ne.s32.totalorder %s25, %s28
      %p34 = scmp.eq.s32.totalorder %s15, 0
      %p35 = por %p33, %p34
      %p36 = scmp.ne.s32.totalorder %s25, %s28
      %p37 = scmp.eq.s32.totalorder %s20, 1
      %p38 = por %p36, %p37
      %p39 = scmp.ne.s32.totalorder %s28, %s29
      %p40 = scmp.eq.s32.totalorder %s20, 0
      %p41 = por %p39, %p40
      %p42 = scmp.ne.s32.totalorder %s28, %s29
      %p43 = scmp.eq.s32.totalorder %s21, 1
      %p44 = por %p42, %p43
      %p46 = scmp.ne.s32.totalorder %s29, %s45
      %p47 = scmp.eq.s32.totalorder %s21, 0
      %p48 = por %p46, %p47
      %s50 = sadd.s32 %s49, 1
      %p53 = scmp.eq.s32.totalorder %s15, 1
      %p54 = scmp.ne.s32.totalorder %s49, %s51
      %p55 = scmp.eq.s32.totalorder %s15, 0
      %p56 = por %p54, %p55
      %p57 = scmp.ne.s32.totalorder %s49, %s51
      %p58 = scmp.eq.s32.totalorder %s20, 1
      %p59 = por %p57, %p58
      %p60 = scmp.ne.s32.totalorder %s51, %s52
      %p61 = scmp.eq.s32.totalorder %s20, 0
      %p62 = por %p60, %p61
      %p63 = scmp.ne.s32.totalorder %s51, %s52
      %p64 = scmp.eq.s32.totalorder %s21, 1
      %p65 = por %p63, %p64
      %p67 = scmp.ne.s32.totalorder %s52, %s66
      %p68 = scmp.eq.s32.totalorder %s21, 0
      %p69 = por %p67, %p68
      %s71 = sadd.s32 %s70, 1
      %p74 = scmp.eq.s32.totalorder %s15, 1
      %p75 = scmp.ne.s32.totalorder %s70, %s72
      %p76 = scmp.eq.s32.totalorder %s15, 0
      %p77 = por %p75, %p76
      %p78 = scmp.ne.s32.totalorder %s70, %s72
      %p79 = scmp.eq.s32.totalorder %s20, 1
      %p80 = por %p78, %p79
      %p81 = scmp.ne.s32.totalorder %s72, %s73
      %p82 = scmp.eq.s32.totalorder %s20, 0
      %p83 = por %p81, %p82
      %p84 = scmp.ne.s32.totalorder %s72, %s73
      %p85 = scmp.eq.s32.totalorder %s21, 1
      %p86 = por %p84, %p85
      %p88 = scmp.ne.s32.totalorder %s73, %s87
      %p89 = scmp.eq.s32.totalorder %s21, 0
      %p90 = por %p88, %p89
      %s91 = ssub.s32 %s15, %s22
      %p92 = scmp.eq.s32.totalorder %s91, 0
      %s94 = sadd.s32 %s93, 1
      %s95 = scalar_select %p92, %s93, %s94
      %p98 = pneg %p92
      %p99 = scmp.eq.s32.totalorder %s15, 1
      %p100 = por %p98, %p99
      %p101 = scmp.ne.s32.totalorder %s93, %s96
      %p102 = scmp.eq.s32.totalorder %s15, 0
      %p103 = por %p101, %p102
      %p104 = scmp.ne.s32.totalorder %s93, %s96
      %p105 = scmp.eq.s32.totalorder %s20, 1
      %p106 = por %p104, %p105
      %p107 = scmp.ne.s32.totalorder %s96, %s97
      %p108 = scmp.eq.s32.totalorder %s20, 0
      %p109 = por %p107, %p108
      %p110 = scmp.ne.s32.totalorder %s96, %s97
      %p111 = scmp.eq.s32.totalorder %s21, 1
      %p112 = por %p110, %p111
      %p114 = scmp.ne.s32.totalorder %s97, %s113
      %p115 = scmp.eq.s32.totalorder %s21, 0
      %p116 = por %p114, %p115
      %p117 = scmp.le.s32.totalorder 1, %s15
      %p118 = scmp.lt.s32.totalorder %s15, 3
      %p119 = pnand %p117, %p118
      %p120 = pneg %p119
      // Predicated region
      $region9: #{tpu_custom_call.1} parent=5 // pred_check
        _
      $region10: #{tpu_custom_call.1} parent=5 // pred_check_branch
        %122 = sbr.rel (%p119) target = $region12
      $region11: #{tpu_custom_call.1} parent=5 // pred_region
        %s123 = ssub.s32 %s15, 1
        // Predicated region
        $region13: #{tpu_custom_call.1} parent=11 // pred_check
          %p124 = pneg %p62
        $region14: #{tpu_custom_call.1} parent=11 // pred_check_branch
          %126 = sbr.rel (%p124) target = $region16
        $region15: #{tpu_custom_call.1} parent=11 // pred_region
          _
        $region16: #{tpu_custom_call.1} parent=11 // pred_fallthru
          _
        // Predicated region
        $region17: #{tpu_custom_call.1} parent=11 // pred_check
          %p127 = pneg %p83
        $region18: #{tpu_custom_call.1} parent=11 // pred_check_branch
          %129 = sbr.rel (%p127) target = $region20
        $region19: #{tpu_custom_call.1} parent=11 // pred_region
          _
        $region20: #{tpu_custom_call.1} parent=11 // pred_fallthru
          _
      $region12: #{tpu_custom_call.1} parent=5 // pred_fallthru
        _
      %p130 = scmp.lt.s32.totalorder %s15, 2
      // Predicated region
      $region21: #{tpu_custom_call.1} parent=5 // pred_check
        %p131 = pneg %p130
      $region22: #{tpu_custom_call.1} parent=5 // pred_check_branch
        %133 = sbr.rel (%p131) target = $region24
      $region23: #{tpu_custom_call.1} parent=5 // pred_region
        // Predicated region
        $region25: #{tpu_custom_call.1} parent=23 // pred_check
          %p134 = pneg %p35
        $region26: #{tpu_custom_call.1} parent=23 // pred_check_branch
          %136 = sbr.rel (%p134) target = $region28
        $region27: #{tpu_custom_call.1} parent=23 // pred_region
          %s137 = sand.u32 %s25, 1
          %s138 = scalar_lea.sflag [#allocation3], %s137
          %s139 = sand.u32 %s25, 1
          %s140 = smul.addr %s139, 6
          %s141 = scalar_lea.vmem [#allocation2], %s140
          %143 = vsyncadd %s138, 0
          %s144 = smul.addr %s15, 3
          %s145 = smul.addr %s144, 2
          %s146 = scalar_lea.hbm %s0, %s145
          %s148 = sshll.u32 %s146, 4
          %s149 = int_to_ptr.hbm [resolvable:$true] %s148
          %s150 = sshll.u32 %s141, 4
          %s151 = int_to_ptr.vmem [resolvable:$true] %s150
          %153 = dma.hbm_to_vmem [thread:$0]  %s149, 96, %s151, %s138
        $region28: #{tpu_custom_call.1} parent=23 // pred_fallthru
          _
      $region24: #{tpu_custom_call.1} parent=5 // pred_fallthru
        _
      %p154 = scmp.le.s32.totalorder 1, %s15
      %p155 = scmp.lt.s32.totalorder %s15, 3
      %p156 = pnand %p154, %p155
      %p157 = pneg %p156
      // Predicated region
      $region29: #{tpu_custom_call.1} parent=5 // pred_check
        _
      $region30: #{tpu_custom_call.1} parent=5 // pred_check_branch
        %159 = sbr.rel (%p156) target = $region32
      $region31: #{tpu_custom_call.1} parent=5 // pred_region
        %s160 = ssub.s32 %s15, 1
        %s161 = sand.u32 %s28, 1
        %s162 = scalar_lea.sflag [#allocation3], %s161
        %s163 = sand.u32 %s28, 1
        %s164 = smul.addr %s163, 6
        %s165 = scalar_lea.vmem [#allocation2], %s164
        // Predicated region
        $region33: #{tpu_custom_call.1} parent=31 // pred_check
          %p166 = pneg %p41
        $region34: #{tpu_custom_call.1} parent=31 // pred_check_branch
          %168 = sbr.rel (%p166) target = $region36
        $region35: #{tpu_custom_call.1} parent=31 // pred_region
          %170 = dma.done %s162, 96
        $region36: #{tpu_custom_call.1} parent=31 // pred_fallthru
          _
        %s171 = sand.u32 %s28, 1
        %s172 = scalar_lea.sflag [#allocation3], %s171
        %s173 = sand.u32 %s28, 1
        %s174 = smul.addr %s173, 6
        %s175 = scalar_lea.vmem [#allocation2], %s174
        %p176 = pneg %p41
        %p177 = pneg %p38
        %p178 = pneg %p62
        %p179 = pneg %p59
        %p180 = pneg %p83
        %p181 = pneg %p80
        %p182 = pneg %p109
        %p183 = pneg %p106
        %s184 = sand.u32 %s96, 1
        %s185 = scalar_lea.sflag [#allocation4], %s184
        %s186 = sand.u32 %s96, 1
        %s187 = smul.addr %s186, 24
        %s188 = scalar_lea.vmem [#allocation5], %s187
        %v190 = vld [vmem:[%s1] sm:$0xf]
        %v191 = vld [vmem:[%s2] sm:$0xff]
        %v192 = vld [vmem:[%s165] sm:$0x3f]
        %v194 = vunpack.c.l.b16 %v190
        %v195 = vpack.c.b16 %v194, %v194
        %196 = vrot.lane.b32.xlu0 %v195, 124
        %v197 = vpop.permute.xlu0 %196
        %199 = vst [vmem:[#allocation1] ss:$4 sm:$0xff] %v192
        %v200 = vld.sshfl [vmem:[#allocation1] sm:$0xff pattern:$0x73625140]
        %v202 = vld.sshfl [vmem:[#allocation1 + $0x8] sm:$0xff pattern:$0x73625140]
        %v204 = vld.sshfl [vmem:[#allocation1 + $0x10] sm:$0xff pattern:$0x73625140]
        %206 = vrot.lane.b32.xlu0 %v200, 127
        %v207 = vpop.permute.xlu0 %206
        %208 = vrot.lane.b32.xlu0 %v202, 127
        %v209 = vpop.permute.xlu0 %208
        %210 = vrot.lane.b32.xlu0 %v204, 127
        %v211 = vpop.permute.xlu0 %210
        %vm212 = vcmask 1039360
        %v213 = vsel %vm212, %v207, %v209
        %v214 = vsel %vm212, %v209, %v211
        %vm215 = vcmask 31744
        %v217 = vsel %vm215, %v197, 0
        %vm219 = vcmask 1041408
        %v221 = vsel %vm219, %v213, 0
        %v224 = vsel %vm219, %v214, 0
        %v227 = vsel %vm219, %v211, 0
        %229 = vmatpush.bf16.msra.mxu0 0
        %230 = vmatpush.bf16.msra.mxu0 0
        %231 = vmatpush.bf16.msra.mxu0 0
        %232 = vmatpush.bf16.msra.mxu0 0
        %233 = vmatpush.bf16.msra.mxu0 0
        %234 = vmatpush.bf16.msra.mxu0 0
        %235 = vmatpush.bf16.msra.mxu0 0
        %236 = vmatpush.bf16.msra.mxu0 %v221
        %237 = vmatmul.bf16.gmra.mxu0 %v217
        %v238 = vpop.f32.mrf.mxu0
        %v239 = vadd.f32 0.0, %v238
        %v240 = vpop.f32.mrf.mxu0
        %241 = vdwg.mxu0
        %242 = vmatpush.bf16.msra.mxu0 0
        %243 = vmatpush.bf16.msra.mxu0 0
        %244 = vmatpush.bf16.msra.mxu0 0
        %245 = vmatpush.bf16.msra.mxu0 0
        %246 = vmatpush.bf16.msra.mxu0 0
        %247 = vmatpush.bf16.msra.mxu0 0
        %248 = vmatpush.bf16.msra.mxu0 0
        %249 = vmatpush.bf16.msra.mxu0 %v224
        %250 = vmatmul.bf16.gmra.mxu0 %v217
        %v251 = vpop.f32.mrf.mxu0
        %v252 = vadd.f32 0.0, %v251
        %v253 = vpop.f32.mrf.mxu0
        %254 = vdwg.mxu0
        %255 = vmatpush.bf16.msra.mxu0 0
        %256 = vmatpush.bf16.msra.mxu0 0
        %257 = vmatpush.bf16.msra.mxu0 0
        %258 = vmatpush.bf16.msra.mxu0 0
        %259 = vmatpush.bf16.msra.mxu0 0
        %260 = vmatpush.bf16.msra.mxu0 0
        %261 = vmatpush.bf16.msra.mxu0 0
        %262 = vmatpush.bf16.msra.mxu0 %v227
        %263 = vmatmul.bf16.gmra.mxu0 %v217
        %v264 = vpop.f32.mrf.mxu0
        %v265 = vadd.f32 0.0, %v264
        %v266 = vpop.f32.mrf.mxu0
        %267 = vdwg.mxu0
        %268 = vst [vmem:[#allocation1] ss:$4 sm:$0xff] %v192
        %v269 = vld.sshfl [vmem:[#allocation1] sm:$0xff pattern:$0x73625140]
        %v270 = vld.sshfl [vmem:[#allocation1 + $0x8] sm:$0xff pattern:$0x73625140]
        %v271 = vld.sshfl [vmem:[#allocation1 + $0x10] sm:$0xff pattern:$0x73625140]
        %v273 = vsel %vm215, %v190, 0
        %v275 = vsel %vm219, %v269, 0
        %v277 = vsel %vm219, %v270, 0
        %v279 = vsel %vm219, %v271, 0
        %281 = vmatpush.bf16.msra.mxu0 0
        %282 = vmatpush.bf16.msra.mxu0 0
        %283 = vmatpush.bf16.msra.mxu0 0
        %284 = vmatpush.bf16.msra.mxu0 0
        %285 = vmatpush.bf16.msra.mxu0 0
        %286 = vmatpush.bf16.msra.mxu0 0
        %287 = vmatpush.bf16.msra.mxu0 0
        %288 = vmatpush.bf16.msra.mxu0 %v275
        %289 = vmatmul.bf16.gmra.mxu0 %v273
        %v290 = vpop.f32.mrf.mxu0
        %v291 = vadd.f32 %v239, %v290
        %v292 = vpop.f32.mrf.mxu0
        %293 = vdwg.mxu0
        %294 = vmatpush.bf16.msra.mxu0 0
        %295 = vmatpush.bf16.msra.mxu0 0
        %296 = vmatpush.bf16.msra.mxu0 0
        %297 = vmatpush.bf16.msra.mxu0 0
        %298 = vmatpush.bf16.msra.mxu0 0
        %299 = vmatpush.bf16.msra.mxu0 0
        %300 = vmatpush.bf16.msra.mxu0 0
        %301 = vmatpush.bf16.msra.mxu0 %v277
        %302 = vmatmul.bf16.gmra.mxu0 %v273
        %v303 = vpop.f32.mrf.mxu0
        %v304 = vadd.f32 %v252, %v303
        %v305 = vpop.f32.mrf.mxu0
        %306 = vdwg.mxu0
        %307 = vmatpush.bf16.msra.mxu0 0
        %308 = vmatpush.bf16.msra.mxu0 0
        %309 = vmatpush.bf16.msra.mxu0 0
        %310 = vmatpush.bf16.msra.mxu0 0
        %311 = vmatpush.bf16.msra.mxu0 0
        %312 = vmatpush.bf16.msra.mxu0 0
        %313 = vmatpush.bf16.msra.mxu0 0
        %314 = vmatpush.bf16.msra.mxu0 %v279
        %315 = vmatmul.bf16.gmra.mxu0 %v273
        %v316 = vpop.f32.mrf.mxu0
        %v317 = vadd.f32 %v265, %v316
        %v318 = vpop.f32.mrf.mxu0
        %319 = vdwg.mxu0
        %v320 = vld [vmem:[%s165] sm:$0x3f]
        %321 = vrot.lane.b32.xlu0 %v195, 120
        %v322 = vpop.permute.xlu0 %321
        %324 = vst [vmem:[#allocation1] ss:$4 sm:$0xff] %v320
        %v325 = vld.sshfl [vmem:[#allocation1] sm:$0xff pattern:$0x73625140]
        %v327 = vld.sshfl [vmem:[#allocation1 + $0x8] sm:$0xff pattern:$0x73625140]
        %v329 = vld.sshfl [vmem:[#allocation1 + $0x10] sm:$0xff pattern:$0x73625140]
        %331 = vrot.lane.b32.xlu0 %v325, 126
        %v332 = vpop.permute.xlu0 %331
        %333 = vrot.lane.b32.xlu0 %v327, 126
        %v334 = vpop.permute.xlu0 %333
        %335 = vrot.lane.b32.xlu0 %v329, 126
        %v336 = vpop.permute.xlu0 %335
        %vm337 = vcmask 1031168
        %v338 = vsel %vm337, %v332, %v334
        %v339 = vsel %vm337, %v334, %v336
        %v341 = vsel %vm215, %v322, 0
        %v344 = vsel %vm219, %v338, 0
        %v347 = vsel %vm219, %v339, 0
        %v350 = vsel %vm219, %v336, 0
        %352 = vmatpush.bf16.msra.mxu0 0
        %353 = vmatpush.bf16.msra.mxu0 0
        %354 = vmatpush.bf16.msra.mxu0 0
        %355 = vmatpush.bf16.msra.mxu0 0
        %356 = vmatpush.bf16.msra.mxu0 0
        %357 = vmatpush.bf16.msra.mxu0 0
        %358 = vmatpush.bf16.msra.mxu0 0
        %359 = vmatpush.bf16.msra.mxu0 %v344
        %360 = vmatmul.bf16.gmra.mxu0 %v341
        %v361 = vpop.f32.mrf.mxu0
        %v362 = vadd.f32 0.0, %v361
        %v363 = vpop.f32.mrf.mxu0
        %364 = vdwg.mxu0
        %365 = vmatpush.bf16.msra.mxu0 0
        %366 = vmatpush.bf16.msra.mxu0 0
        %367 = vmatpush.bf16.msra.mxu0 0
        %368 = vmatpush.bf16.msra.mxu0 0
        %369 = vmatpush.bf16.msra.mxu0 0
        %370 = vmatpush.bf16.msra.mxu0 0
        %371 = vmatpush.bf16.msra.mxu0 0
        %372 = vmatpush.bf16.msra.mxu0 %v347
        %373 = vmatmul.bf16.gmra.mxu0 %v341
        %v374 = vpop.f32.mrf.mxu0
        %v375 = vadd.f32 0.0, %v374
        %v376 = vpop.f32.mrf.mxu0
        %377 = vdwg.mxu0
        %378 = vmatpush.bf16.msra.mxu0 0
        %379 = vmatpush.bf16.msra.mxu0 0
        %380 = vmatpush.bf16.msra.mxu0 0
        %381 = vmatpush.bf16.msra.mxu0 0
        %382 = vmatpush.bf16.msra.mxu0 0
        %383 = vmatpush.bf16.msra.mxu0 0
        %384 = vmatpush.bf16.msra.mxu0 0
        %385 = vmatpush.bf16.msra.mxu0 %v350
        %386 = vmatmul.bf16.gmra.mxu0 %v341
        %v387 = vpop.f32.mrf.mxu0
        %v388 = vadd.f32 0.0, %v387
        %v389 = vpop.f32.mrf.mxu0
        %390 = vdwg.mxu0
        %v391 = vadd.f32 %v291, %v362
        %v392 = vadd.f32 %v304, %v375
        %v393 = vadd.f32 %v317, %v388
        %v394 = vld [vmem:[%s165] sm:$0x3f]
        %395 = vrot.lane.b32.xlu0 %v195, 116
        %v396 = vpop.permute.xlu0 %395
        %398 = vst [vmem:[#allocation1] ss:$4 sm:$0xff] %v394
        %v399 = vld.sshfl [vmem:[#allocation1] sm:$0xff pattern:$0x73625140]
        %v401 = vld.sshfl [vmem:[#allocation1 + $0x8] sm:$0xff pattern:$0x73625140]
        %v403 = vld.sshfl [vmem:[#allocation1 + $0x10] sm:$0xff pattern:$0x73625140]
        %405 = vrot.lane.b32.xlu0 %v399, 110
        %v406 = vpop.permute.xlu0 %405
        %407 = vrot.lane.b32.xlu0 %v401, 110
        %v408 = vpop.permute.xlu0 %407
        %409 = vrot.lane.b32.xlu0 %v403, 110
        %v410 = vpop.permute.xlu0 %409
        %vm411 = vcmask 900096
        %v412 = vsel %vm411, %v406, %v408
        %v413 = vsel %vm411, %v408, %v410
        %v415 = vsel %vm215, %v396, 0
        %v418 = vsel %vm219, %v412, 0
        %v421 = vsel %vm219, %v413, 0
        %v424 = vsel %vm219, %v410, 0
        %426 = vmatpush.bf16.msra.mxu0 0
        %427 = vmatpush.bf16.msra.mxu0 0
        %428 = vmatpush.bf16.msra.mxu0 0
        %429 = vmatpush.bf16.msra.mxu0 0
        %430 = vmatpush.bf16.msra.mxu0 0
        %431 = vmatpush.bf16.msra.mxu0 0
        %432 = vmatpush.bf16.msra.mxu0 0
        %433 = vmatpush.bf16.msra.mxu0 %v418
        %434 = vmatmul.bf16.gmra.mxu0 %v415
        %v435 = vpop.f32.mrf.mxu0
        %v436 = vadd.f32 0.0, %v435
        %v437 = vpop.f32.mrf.mxu0
        %438 = vdwg.mxu0
        %439 = vmatpush.bf16.msra.mxu0 0
        %440 = vmatpush.bf16.msra.mxu0 0
        %441 = vmatpush.bf16.msra.mxu0 0
        %442 = vmatpush.bf16.msra.mxu0 0
        %443 = vmatpush.bf16.msra.mxu0 0
        %444 = vmatpush.bf16.msra.mxu0 0
        %445 = vmatpush.bf16.msra.mxu0 0
        %446 = vmatpush.bf16.msra.mxu0 %v421
        %447 = vmatmul.bf16.gmra.mxu0 %v415
        %v448 = vpop.f32.mrf.mxu0
        %v449 = vadd.f32 0.0, %v448
        %v450 = vpop.f32.mrf.mxu0
        %451 = vdwg.mxu0
        %452 = vmatpush.bf16.msra.mxu0 0
        %453 = vmatpush.bf16.msra.mxu0 0
        %454 = vmatpush.bf16.msra.mxu0 0
        %455 = vmatpush.bf16.msra.mxu0 0
        %456 = vmatpush.bf16.msra.mxu0 0
        %457 = vmatpush.bf16.msra.mxu0 0
        %458 = vmatpush.bf16.msra.mxu0 0
        %459 = vmatpush.bf16.msra.mxu0 %v424
        %460 = vmatmul.bf16.gmra.mxu0 %v415
        %v461 = vpop.f32.mrf.mxu0
        %v462 = vadd.f32 0.0, %v461
        %v463 = vpop.f32.mrf.mxu0
        %464 = vdwg.mxu0
        %v465 = vadd.f32 %v391, %v436
        %v466 = vadd.f32 %v392, %v449
        %v467 = vadd.f32 %v393, %v462
        %v468 = vld [vmem:[%s165] sm:$0x3f]
        %469 = vrot.lane.b32.xlu0 %v195, 112
        %v470 = vpop.permute.xlu0 %469
        %472 = vst [vmem:[#allocation1] ss:$4 sm:$0xff] %v468
        %v473 = vld.sshfl [vmem:[#allocation1] sm:$0xff pattern:$0x73625140]
        %v475 = vld.sshfl [vmem:[#allocation1 + $0x8] sm:$0xff pattern:$0x73625140]
        %v477 = vld.sshfl [vmem:[#allocation1 + $0x10] sm:$0xff pattern:$0x73625140]
        %479 = vrot.lane.b32.xlu0 %v473, 109
        %v480 = vpop.permute.xlu0 %479
        %481 = vrot.lane.b32.xlu0 %v475, 109
        %v482 = vpop.permute.xlu0 %481
        %483 = vrot.lane.b32.xlu0 %v477, 109
        %v484 = vpop.permute.xlu0 %483
        %vm485 = vcmask 891904
        %v486 = vsel %vm485, %v480, %v482
        %v487 = vsel %vm485, %v482, %v484
        %v489 = vsel %vm215, %v470, 0
        %v492 = vsel %vm219, %v486, 0
        %v495 = vsel %vm219, %v487, 0
        %v498 = vsel %vm219, %v484, 0
        %500 = vmatpush.bf16.msra.mxu0 0
        %501 = vmatpush.bf16.msra.mxu0 0
        %502 = vmatpush.bf16.msra.mxu0 0
        %503 = vmatpush.bf16.msra.mxu0 0
        %504 = vmatpush.bf16.msra.mxu0 0
        %505 = vmatpush.bf16.msra.mxu0 0
        %506 = vmatpush.bf16.msra.mxu0 0
        %507 = vmatpush.bf16.msra.mxu0 %v492
        %508 = vmatmul.bf16.gmra.mxu0 %v489
        %v509 = vpop.f32.mrf.mxu0
        %v510 = vadd.f32 0.0, %v509
        %v511 = vpop.f32.mrf.mxu0
        %512 = vdwg.mxu0
        %513 = vmatpush.bf16.msra.mxu0 0
        %514 = vmatpush.bf16.msra.mxu0 0
        %515 = vmatpush.bf16.msra.mxu0 0
        %516 = vmatpush.bf16.msra.mxu0 0
        %517 = vmatpush.bf16.msra.mxu0 0
        %518 = vmatpush.bf16.msra.mxu0 0
        %519 = vmatpush.bf16.msra.mxu0 0
        %520 = vmatpush.bf16.msra.mxu0 %v495
        %521 = vmatmul.bf16.gmra.mxu0 %v489
        %v522 = vpop.f32.mrf.mxu0
        %v523 = vadd.f32 0.0, %v522
        %v524 = vpop.f32.mrf.mxu0
        %525 = vdwg.mxu0
        %526 = vmatpush.bf16.msra.mxu0 0
        %527 = vmatpush.bf16.msra.mxu0 0
        %528 = vmatpush.bf16.msra.mxu0 0
        %529 = vmatpush.bf16.msra.mxu0 0
        %530 = vmatpush.bf16.msra.mxu0 0
        %531 = vmatpush.bf16.msra.mxu0 0
        %532 = vmatpush.bf16.msra.mxu0 0
        %533 = vmatpush.bf16.msra.mxu0 %v498
        %534 = vmatmul.bf16.gmra.mxu0 %v489
        %v535 = vpop.f32.mrf.mxu0
        %v536 = vadd.f32 0.0, %v535
        %v537 = vpop.f32.mrf.mxu0
        %538 = vdwg.mxu0
        %v539 = vadd.f32 %v465, %v510
        %v540 = vadd.f32 %v466, %v523
        %v541 = vadd.f32 %v467, %v536
        %v542 = vld [vmem:[%s165] sm:$0x3f]
        %543 = vrot.lane.b32.xlu0 %v195, 108
        %v544 = vpop.permute.xlu0 %543
        %546 = vst [vmem:[#allocation1] ss:$4 sm:$0xff] %v542
        %v547 = vld.sshfl [vmem:[#allocation1] sm:$0xff pattern:$0x73625140]
        %v549 = vld.sshfl [vmem:[#allocation1 + $0x8] sm:$0xff pattern:$0x73625140]
        %v551 = vld.sshfl [vmem:[#allocation1 + $0x10] sm:$0xff pattern:$0x73625140]
        %553 = vrot.lane.b32.xlu0 %v547, 108
        %v554 = vpop.permute.xlu0 %553
        %555 = vrot.lane.b32.xlu0 %v549, 108
        %v556 = vpop.permute.xlu0 %555
        %557 = vrot.lane.b32.xlu0 %v551, 108
        %v558 = vpop.permute.xlu0 %557
        %vm559 = vcmask 883712
        %v560 = vsel %vm559, %v554, %v556
        %v561 = vsel %vm559, %v556, %v558
        %v563 = vsel %vm215, %v544, 0
        %v566 = vsel %vm219, %v560, 0
        %v569 = vsel %vm219, %v561, 0
        %v572 = vsel %vm219, %v558, 0
        %574 = vmatpush.bf16.msra.mxu0 0
        %575 = vmatpush.bf16.msra.mxu0 0
        %576 = vmatpush.bf16.msra.mxu0 0
        %577 = vmatpush.bf16.msra.mxu0 0
        %578 = vmatpush.bf16.msra.mxu0 0
        %579 = vmatpush.bf16.msra.mxu0 0
        %580 = vmatpush.bf16.msra.mxu0 0
        %581 = vmatpush.bf16.msra.mxu0 %v566
        %582 = vmatmul.bf16.gmra.mxu0 %v563
        %v583 = vpop.f32.mrf.mxu0
        %v584 = vadd.f32 0.0, %v583
        %v585 = vpop.f32.mrf.mxu0
        %586 = vdwg.mxu0
        %587 = vmatpush.bf16.msra.mxu0 0
        %588 = vmatpush.bf16.msra.mxu0 0
        %589 = vmatpush.bf16.msra.mxu0 0
        %590 = vmatpush.bf16.msra.mxu0 0
        %591 = vmatpush.bf16.msra.mxu0 0
        %592 = vmatpush.bf16.msra.mxu0 0
        %593 = vmatpush.bf16.msra.mxu0 0
        %594 = vmatpush.bf16.msra.mxu0 %v569
        %595 = vmatmul.bf16.gmra.mxu0 %v563
        %v596 = vpop.f32.mrf.mxu0
        %v597 = vadd.f32 0.0, %v596
        %v598 = vpop.f32.mrf.mxu0
        %599 = vdwg.mxu0
        %600 = vmatpush.bf16.msra.mxu0 0
        %601 = vmatpush.bf16.msra.mxu0 0
        %602 = vmatpush.bf16.msra.mxu0 0
        %603 = vmatpush.bf16.msra.mxu0 0
        %604 = vmatpush.bf16.msra.mxu0 0
        %605 = vmatpush.bf16.msra.mxu0 0
        %606 = vmatpush.bf16.msra.mxu0 0
        %607 = vmatpush.bf16.msra.mxu0 %v572
        %608 = vmatmul.bf16.gmra.mxu0 %v563
        %v609 = vpop.f32.mrf.mxu0
        %v610 = vadd.f32 0.0, %v609
        %v611 = vpop.f32.mrf.mxu0
        %612 = vdwg.mxu0
        %v613 = vadd.f32 %v539, %v584
        %v614 = vadd.f32 %v540, %v597
        %v615 = vadd.f32 %v541, %v610
        %v616 = vld [vmem:[%s165] sm:$0x3f]
        %617 = vrot.lane.b32.xlu0 %v195, 104
        %v618 = vpop.permute.xlu0 %617
        %620 = vst [vmem:[#allocation1] ss:$4 sm:$0xff] %v616
        %v621 = vld.sshfl [vmem:[#allocation1] sm:$0xff pattern:$0x73625140]
        %v623 = vld.sshfl [vmem:[#allocation1 + $0x8] sm:$0xff pattern:$0x73625140]
        %v625 = vld.sshfl [vmem:[#allocation1 + $0x10] sm:$0xff pattern:$0x73625140]
        %627 = vrot.lane.b32.xlu0 %v621, 92
        %v628 = vpop.permute.xlu0 %627
        %629 = vrot.lane.b32.xlu0 %v623, 92
        %v630 = vpop.permute.xlu0 %629
        %631 = vrot.lane.b32.xlu0 %v625, 92
        %v632 = vpop.permute.xlu0 %631
        %vm633 = vcmask 752640
        %v634 = vsel %vm633, %v628, %v630
        %v635 = vsel %vm633, %v630, %v632
        %v637 = vsel %vm215, %v618, 0
        %v640 = vsel %vm219, %v634, 0
        %v643 = vsel %vm219, %v635, 0
        %v646 = vsel %vm219, %v632, 0
        %648 = vmatpush.bf16.msra.mxu0 0
        %649 = vmatpush.bf16.msra.mxu0 0
        %650 = vmatpush.bf16.msra.mxu0 0
        %651 = vmatpush.bf16.msra.mxu0 0
        %652 = vmatpush.bf16.msra.mxu0 0
        %653 = vmatpush.bf16.msra.mxu0 0
        %654 = vmatpush.bf16.msra.mxu0 0
        %655 = vmatpush.bf16.msra.mxu0 %v640
        %656 = vmatmul.bf16.gmra.mxu0 %v637
        %v657 = vpop.f32.mrf.mxu0
        %v658 = vadd.f32 0.0, %v657
        %v659 = vpop.f32.mrf.mxu0
        %660 = vdwg.mxu0
        %661 = vmatpush.bf16.msra.mxu0 0
        %662 = vmatpush.bf16.msra.mxu0 0
        %663 = vmatpush.bf16.msra.mxu0 0
        %664 = vmatpush.bf16.msra.mxu0 0
        %665 = vmatpush.bf16.msra.mxu0 0
        %666 = vmatpush.bf16.msra.mxu0 0
        %667 = vmatpush.bf16.msra.mxu0 0
        %668 = vmatpush.bf16.msra.mxu0 %v643
        %669 = vmatmul.bf16.gmra.mxu0 %v637
        %v670 = vpop.f32.mrf.mxu0
        %v671 = vadd.f32 0.0, %v670
        %v672 = vpop.f32.mrf.mxu0
        %673 = vdwg.mxu0
        %674 = vmatpush.bf16.msra.mxu0 0
        %675 = vmatpush.bf16.msra.mxu0 0
        %676 = vmatpush.bf16.msra.mxu0 0
        %677 = vmatpush.bf16.msra.mxu0 0
        %678 = vmatpush.bf16.msra.mxu0 0
        %679 = vmatpush.bf16.msra.mxu0 0
        %680 = vmatpush.bf16.msra.mxu0 0
        %681 = vmatpush.bf16.msra.mxu0 %v646
        %682 = vmatmul.bf16.gmra.mxu0 %v637
        %v683 = vpop.f32.mrf.mxu0
        %v684 = vadd.f32 0.0, %v683
        %v685 = vpop.f32.mrf.mxu0
        %686 = vdwg.mxu0
        %v687 = vadd.f32 %v613, %v658
        %v688 = vadd.f32 %v614, %v671
        %v689 = vadd.f32 %v615, %v684
        %v690 = vld [vmem:[%s165] sm:$0x3f]
        %691 = vrot.lane.b32.xlu0 %v195, 100
        %v692 = vpop.permute.xlu0 %691
        %694 = vst [vmem:[#allocation1] ss:$4 sm:$0xff] %v690
        %v695 = vld.sshfl [vmem:[#allocation1] sm:$0xff pattern:$0x73625140]
        %v697 = vld.sshfl [vmem:[#allocation1 + $0x8] sm:$0xff pattern:$0x73625140]
        %v699 = vld.sshfl [vmem:[#allocation1 + $0x10] sm:$0xff pattern:$0x73625140]
        %701 = vrot.lane.b32.xlu0 %v695, 91
        %v702 = vpop.permute.xlu0 %701
        %703 = vrot.lane.b32.xlu0 %v697, 91
        %v704 = vpop.permute.xlu0 %703
        %705 = vrot.lane.b32.xlu0 %v699, 91
        %v706 = vpop.permute.xlu0 %705
        %vm707 = vcmask 744448
        %v708 = vsel %vm707, %v702, %v704
        %v709 = vsel %vm707, %v704, %v706
        %v711 = vsel %vm215, %v692, 0
        %v714 = vsel %vm219, %v708, 0
        %v717 = vsel %vm219, %v709, 0
        %v720 = vsel %vm219, %v706, 0
        %722 = vmatpush.bf16.msra.mxu0 0
        %723 = vmatpush.bf16.msra.mxu0 0
        %724 = vmatpush.bf16.msra.mxu0 0
        %725 = vmatpush.bf16.msra.mxu0 0
        %726 = vmatpush.bf16.msra.mxu0 0
        %727 = vmatpush.bf16.msra.mxu0 0
        %728 = vmatpush.bf16.msra.mxu0 0
        %729 = vmatpush.bf16.msra.mxu0 %v714
        %730 = vmatmul.bf16.gmra.mxu0 %v711
        %v731 = vpop.f32.mrf.mxu0
        %v732 = vadd.f32 0.0, %v731
        %v733 = vpop.f32.mrf.mxu0
        %734 = vdwg.mxu0
        %735 = vmatpush.bf16.msra.mxu0 0
        %736 = vmatpush.bf16.msra.mxu0 0
        %737 = vmatpush.bf16.msra.mxu0 0
        %738 = vmatpush.bf16.msra.mxu0 0
        %739 = vmatpush.bf16.msra.mxu0 0
        %740 = vmatpush.bf16.msra.mxu0 0
        %741 = vmatpush.bf16.msra.mxu0 0
        %742 = vmatpush.bf16.msra.mxu0 %v717
        %743 = vmatmul.bf16.gmra.mxu0 %v711
        %v744 = vpop.f32.mrf.mxu0
        %v745 = vadd.f32 0.0, %v744
        %v746 = vpop.f32.mrf.mxu0
        %747 = vdwg.mxu0
        %748 = vmatpush.bf16.msra.mxu0 0
        %749 = vmatpush.bf16.msra.mxu0 0
        %750 = vmatpush.bf16.msra.mxu0 0
        %751 = vmatpush.bf16.msra.mxu0 0
        %752 = vmatpush.bf16.msra.mxu0 0
        %753 = vmatpush.bf16.msra.mxu0 0
        %754 = vmatpush.bf16.msra.mxu0 0
        %755 = vmatpush.bf16.msra.mxu0 %v720
        %756 = vmatmul.bf16.gmra.mxu0 %v711
        %v757 = vpop.f32.mrf.mxu0
        %v758 = vadd.f32 0.0, %v757
        %v759 = vpop.f32.mrf.mxu0
        %760 = vdwg.mxu0
        %v761 = vadd.f32 %v687, %v732
        %v762 = vadd.f32 %v688, %v745
        %v763 = vadd.f32 %v689, %v758
        %v764 = vld [vmem:[%s165] sm:$0x3f]
        %765 = vrot.lane.b32.xlu0 %v195, 96
        %v766 = vpop.permute.xlu0 %765
        %768 = vst [vmem:[#allocation1] ss:$4 sm:$0xff] %v764
        %v769 = vld.sshfl [vmem:[#allocation1] sm:$0xff pattern:$0x73625140]
        %v771 = vld.sshfl [vmem:[#allocation1 + $0x8] sm:$0xff pattern:$0x73625140]
        %v773 = vld.sshfl [vmem:[#allocation1 + $0x10] sm:$0xff pattern:$0x73625140]
        %775 = vrot.lane.b32.xlu0 %v769, 90
        %v776 = vpop.permute.xlu0 %775
        %777 = vrot.lane.b32.xlu0 %v771, 90
        %v778 = vpop.permute.xlu0 %777
        %779 = vrot.lane.b32.xlu0 %v773, 90
        %v780 = vpop.permute.xlu0 %779
        %vm781 = vcmask 736256
        %v782 = vsel %vm781, %v776, %v778
        %v783 = vsel %vm781, %v778, %v780
        %v785 = vsel %vm215, %v766, 0
        %v788 = vsel %vm219, %v782, 0
        %v791 = vsel %vm219, %v783, 0
        %v794 = vsel %vm219, %v780, 0
        %796 = vmatpush.bf16.msra.mxu0 0
        %797 = vmatpush.bf16.msra.mxu0 0
        %798 = vmatpush.bf16.msra.mxu0 0
        %799 = vmatpush.bf16.msra.mxu0 0
        %800 = vmatpush.bf16.msra.mxu0 0
        %801 = vmatpush.bf16.msra.mxu0 0
        %802 = vmatpush.bf16.msra.mxu0 0
        %803 = vmatpush.bf16.msra.mxu0 %v788
        %804 = vmatmul.bf16.gmra.mxu0 %v785
        %v805 = vpop.f32.mrf.mxu0
        %v806 = vadd.f32 0.0, %v805
        %v807 = vpop.f32.mrf.mxu0
        %808 = vdwg.mxu0
        %809 = vmatpush.bf16.msra.mxu0 0
        %810 = vmatpush.bf16.msra.mxu0 0
        %811 = vmatpush.bf16.msra.mxu0 0
        %812 = vmatpush.bf16.msra.mxu0 0
        %813 = vmatpush.bf16.msra.mxu0 0
        %814 = vmatpush.bf16.msra.mxu0 0
        %815 = vmatpush.bf16.msra.mxu0 0
        %816 = vmatpush.bf16.msra.mxu0 %v791
        %817 = vmatmul.bf16.gmra.mxu0 %v785
        %v818 = vpop.f32.mrf.mxu0
        %v819 = vadd.f32 0.0, %v818
        %v820 = vpop.f32.mrf.mxu0
        %821 = vdwg.mxu0
        %822 = vmatpush.bf16.msra.mxu0 0
        %823 = vmatpush.bf16.msra.mxu0 0
        %824 = vmatpush.bf16.msra.mxu0 0
        %825 = vmatpush.bf16.msra.mxu0 0
        %826 = vmatpush.bf16.msra.mxu0 0
        %827 = vmatpush.bf16.msra.mxu0 0
        %828 = vmatpush.bf16.msra.mxu0 0
        %829 = vmatpush.bf16.msra.mxu0 %v794
        %830 = vmatmul.bf16.gmra.mxu0 %v785
        %v831 = vpop.f32.mrf.mxu0
        %v832 = vadd.f32 0.0, %v831
        %v833 = vpop.f32.mrf.mxu0
        %834 = vdwg.mxu0
        %v835 = vadd.f32 %v761, %v806
        %v836 = vadd.f32 %v762, %v819
        %v837 = vadd.f32 %v763, %v832
        %839 = vset.pattern.permute.xlu0 0
        %840 = vperm.xlu0 %839, %v191
        %v841 = vpop.permute.xlu0 %840
        %v843 = vadd.f32 %v835, %v841
        %v844 = vadd.f32 %v836, %v841
        %v845 = vadd.f32 %v837, %v841
        %846 = vst [vmem:[%s188] sm:$0xff] %v843
        %847 = vst [vmem:[%s188 + $0x8] sm:$0xff] %v844
        %vm848 = vcmask 261120
        %849 = vst.msk [vmem:[%s188 + $0x10] sm:$0xff] %vm848, %v845
        %s850 = sand.u32 %s96, 1
        %s851 = scalar_lea.sflag [#allocation4], %s850
        %s852 = sand.u32 %s96, 1
        %s853 = smul.addr %s852, 24
        %s854 = scalar_lea.vmem [#allocation5], %s853
        // Predicated region
        $region37: #{tpu_custom_call.1} parent=31 // pred_check
          %p855 = pneg %p106
        $region38: #{tpu_custom_call.1} parent=31 // pred_check_branch
          %857 = sbr.rel (%p855) target = $region40
        $region39: #{tpu_custom_call.1} parent=31 // pred_region
          %859 = vsyncadd %s851, 0
          %s860 = smul.addr %s20, 3
          %s861 = smul.addr %s860, 8
          %s862 = scalar_lea.hbm %s3, %s861
          %s864 = sshll.u32 %s854, 4
          %s865 = int_to_ptr.vmem [resolvable:$true] %s864
          %s866 = sshll.u32 %s862, 4
          %s867 = int_to_ptr.hbm [resolvable:$true] %s866
          %869 = dma.vmem_to_hbm [thread:$0]  %s865, 384, %s867, %s851
        $region40: #{tpu_custom_call.1} parent=31 // pred_fallthru
          _
      $region32: #{tpu_custom_call.1} parent=5 // pred_fallthru
        _
      %p870 = scmp.le.s32.totalorder 2, %s15
      // Predicated region
      $region41: #{tpu_custom_call.1} parent=5 // pred_check
        %p871 = pneg %p870
      $region42: #{tpu_custom_call.1} parent=5 // pred_check_branch
        %873 = sbr.rel (%p871) target = $region44
      $region43: #{tpu_custom_call.1} parent=5 // pred_region
        %s874 = ssub.s32 %s15, 2
        // Predicated region
        $region45: #{tpu_custom_call.1} parent=43 // pred_check
          %p875 = pneg %p112
        $region46: #{tpu_custom_call.1} parent=43 // pred_check_branch
          %877 = sbr.rel (%p875) target = $region48
        $region47: #{tpu_custom_call.1} parent=43 // pred_region
          %s878 = sand.u32 %s97, 1
          %s879 = scalar_lea.sflag [#allocation4], %s878
          %s880 = sand.u32 %s97, 1
          %s881 = smul.addr %s880, 24
          %s882 = scalar_lea.vmem [#allocation5], %s881
          %884 = dma.done %s879, 384
        $region48: #{tpu_custom_call.1} parent=43 // pred_fallthru
          _
      $region44: #{tpu_custom_call.1} parent=5 // pred_fallthru
        _
    $region6: #{tpu_custom_call.1} parent=1 // loop_footer
      %s19 = sadd.s32 1, %s15
    $region7: #{tpu_custom_call.1} parent=1 // loop_footer_branch
      %14 = sbr.rel target = $region3
    $region8: #{tpu_custom_call.1} parent=1 // loop_exit
      _
    %885 = vsyncpa [#allocation3], 1
    %s886 = scalar_lea.sflag [#allocation3], 1
    %887 = vsyncpa %s886, 1
    %888 = vsyncpa [#allocation4], 1
    %s889 = scalar_lea.sflag [#allocation4], 1
    %890 = vsyncpa %s889, 1

</llo_original>
